<compile_context>
chip_gen: v7x
topology: tpu7x:2x2x1
jax: 0.10.0
libtpu: 0.0.40
codegen_flags: <defaults>
</compile_context>

<pallas_src>
import functools

import jax
import jax.numpy as jnp
from jax.experimental import pallas as pl
from jax.experimental.pallas import tpu as pltpu


def _identity_kernel(x_ref, o_ref):
    # forward(x) returns x unchanged. The tanh/cat/sin ops in the PyTorch module
    # are dead (results discarded), so they are intentionally not emitted here.
    o_ref[...] = x_ref[...]


@functools.partial(jax.jit, donate_argnums=(0,))
def model_forward(x):
    return pl.pallas_call(
        _identity_kernel,
        out_shape=jax.ShapeDtypeStruct(x.shape, x.dtype),
        in_specs=[pl.BlockSpec(memory_space=pltpu.MemorySpace.VMEM)],
        out_specs=pl.BlockSpec(memory_space=pltpu.MemorySpace.VMEM),
        input_output_aliases={0: 0},
    )(x)


if __name__ == "__main__":
    key = jax.random.PRNGKey(0)
    x = jax.random.normal(key, (2, 3, 4), dtype=jnp.float32)

    # Keep an independent copy for verification, since x's buffer is donated
    # (aliased) to the kernel output.
    expected = x.copy()

    out = model_forward(x)
    jax.block_until_ready(out)

    # Forward semantics: output must be exactly the original x.
    assert out.shape == expected.shape and out.dtype == expected.dtype
    assert bool(jnp.all(out == expected))

    print("KERNEL_OK")
</pallas_src>

<mosaic_0001>
module attributes {stable_mosaic.version = 11 : i64} {
  func.func @_identity_kernel(%arg0: memref<2x3x4xf32, #tpu.memory_space<vmem>>, %arg1: memref<2x3x4xf32, #tpu.memory_space<vmem>>) attributes {dimension_semantics = [], scalar_prefetch = 0 : i64, scratch_operands = 0 : i64, tpu.core_type = #tpu.core_type<tc>} {
    %c0 = arith.constant 0 : index
    %c0_0 = arith.constant 0 : index
    %c0_1 = arith.constant 0 : index
    %0 = vector.load %arg0[%c0, %c0_0, %c0_1] : memref<2x3x4xf32, #tpu.memory_space<vmem>>, vector<2x3x4xf32>
    %c0_2 = arith.constant 0 : index
    %c0_3 = arith.constant 0 : index
    %c0_4 = arith.constant 0 : index
    %1 = vector.load %arg1[%c0_2, %c0_3, %c0_4] : memref<2x3x4xf32, #tpu.memory_space<vmem>>, vector<2x3x4xf32>
    tpu.vector_store %arg1[%c0_2, %c0_3, %c0_4], %0 {strides = array<i32>} : memref<2x3x4xf32, #tpu.memory_space<vmem>>, vector<2x3x4xf32>,
    return
  }
}

</mosaic_0001>

<llo_original>
// kernel: model_forward.1
$region0: #{model_forward.1}
  #allocation0 [shape = 'u32[]', space=smem, size = 0x4, offset = 0x4, fixed_abs, tag = 'smem constant byte address 0x4 - core index']
  #allocation1 [shape = 'u32[144,128]{1,0:T(1,128)}', space=vmem, size = 0x12000, scoped, tag = 'internal scratch']
  %s0 = inlined_call_operand.vmem [shape: f32[2,3,4], index: 0, kind: input, shape index: {}, may-alias: {0,1}]
  %s1 = inlined_call_operand.vmem [shape: f32[2,3,4], index: 1, kind: output, shape index: {}, may-alias: {0,1}]
  %s2 = sld [smem:[#allocation0]]
  $region14: #{model_forward.1} parent=0
    _
  %s4 = ssub.s32 1, %s2
  %s5 = scalar_select 0, %s4, %s2
  // Predicated region
  $region2: #{model_forward.1} parent=0 // pred_check
    _
  $region3: #{model_forward.1} parent=0 // pred_check_branch
    %7 = sbr.rel (0) target = $region5
  $region4: #{model_forward.1} parent=0 // pred_region
    _
  $region5: #{model_forward.1} parent=0 // pred_fallthru
    _
  %v8 = vld [vmem:[%s0] sm:$0x7]
  %v9 = vld [vmem:[%s0 + $0x4] sm:$0x7]
  %vm10 = vcmask 26624
  %11 = vst.msk [vmem:[%s1] sm:$0x7] %vm10, %v8
  %12 = vst.msk [vmem:[%s1 + $0x4] sm:$0x7] %vm10, %v9
  // Predicated region
  $region6: #{model_forward.1} parent=0 // pred_check
    _
  $region7: #{model_forward.1} parent=0 // pred_check_branch
    %14 = sbr.rel (0) target = $region9
  $region8: #{model_forward.1} parent=0 // pred_region
    _
  $region9: #{model_forward.1} parent=0 // pred_fallthru
    _
  // Predicated region
  $region10: #{model_forward.1} parent=0 // pred_check
    _
  $region11: #{model_forward.1} parent=0 // pred_check_branch
    %16 = sbr.rel (0) target = $region13
  $region12: #{model_forward.1} parent=0 // pred_region
    _
  $region13: #{model_forward.1} parent=0 // pred_fallthru
    _

</llo_original>
